<compile_context>
chip_gen: v7x
topology: tpu7x:2x2x1
jax: 0.10.0
libtpu: 0.0.40
codegen_flags: <defaults>
</compile_context>

<pallas_src>
import jax
import jax.numpy as jnp
from jax.experimental import pallas as pl
from jax.experimental.pallas import tpu as pltpu


def _layerscale_kernel(x_ref, gamma_ref, o_ref):
    # x_ref: (tile_r, lane) VMEM tile; gamma_ref: (1, lane) VMEM tile.
    # Pure VPU elementwise multiply with sublane-broadcast of gamma.
    o_ref[...] = x_ref[...] * gamma_ref[...]


def _sublane(itemsize: int) -> int:
    if itemsize >= 4:
        return 8
    if itemsize == 2:
        return 16
    return 32


def _pick_tile_rows(rows: int, lane: int, itemsize: int) -> int:
    """Row-tile size: multiple of the sublane packing, capped so one block is
    <= ~4 MiB -> (in + out) * 2 double-buffers ~ 16 MiB (safe on v7x)."""
    sub = _sublane(itemsize)
    budget_bytes = 4 * 1024 * 1024
    t = budget_bytes // max(1, lane * itemsize)
    t = max(sub, min(1024, t))
    t = (t // sub) * sub
    if t >= rows:
        return rows  # single block along rows; "full dim" satisfies the (8,128) rule
    return t


def _pick_lane_fold(rows: int, dim: int) -> int:
    """Fold consecutive rows into the lane axis when dim < 128 so the output
    block's last dim is a multiple of 128 (lane-dense, unmasked stores)."""
    if dim >= 128:
        return 1
    for target in (512, 256, 128):
        cand = target // dim
        if cand >= 1 and (dim * cand) % 128 == 0 and rows % cand == 0:
            return cand
    return 1


def kan_layer_scale(x: jax.Array, gamma: jax.Array) -> jax.Array:
    """Pallas TPU implementation of KANLayerScale.forward (non-inplace): x * gamma.

    x: (..., dim), gamma: (dim,). Output dtype follows jnp promotion of (x, gamma),
    matching PyTorch's `x * gamma` semantics.
    """
    orig_shape = x.shape
    dim = orig_shape[-1]
    assert gamma.shape == (dim,)

    out_dtype = jnp.result_type(x.dtype, gamma.dtype)

    rows = 1
    for s in orig_shape[:-1]:
        rows *= s

    fold = _pick_lane_fold(rows, dim)
    lane = dim * fold
    rows_f = rows // fold

    x2d = x.reshape(rows_f, lane).astype(out_dtype)
    gamma_row = jnp.tile(gamma.astype(out_dtype), (fold,)).reshape(1, lane)

    itemsize = jnp.dtype(out_dtype).itemsize
    tile_r = _pick_tile_rows(rows_f, lane, itemsize)
    num_tiles = pl.cdiv(rows_f, tile_r)

    out = pl.pallas_call(
        _layerscale_kernel,
        out_shape=jax.ShapeDtypeStruct((rows_f, lane), out_dtype),
        grid_spec=pl.GridSpec(
            grid=(num_tiles,),
            in_specs=[
                pl.BlockSpec((tile_r, lane), lambda i: (i, 0)),
                pl.BlockSpec((1, lane), lambda i: (0, 0)),
            ],
            out_specs=pl.BlockSpec((tile_r, lane), lambda i: (i, 0)),
        ),
        compiler_params=pltpu.CompilerParams(
            dimension_semantics=("parallel",),
        ),
    )(x2d, gamma_row)

    return out.reshape(orig_shape)


if __name__ == "__main__":
    key = jax.random.PRNGKey(0)
    batch, seq, dim = 2, 8, 32
    init_values = 1e-5

    # Deterministic parameter init exactly as in the module's __init__.
    gamma = init_values * jnp.ones((dim,), dtype=jnp.float32)

    x = jax.random.normal(key, (batch, seq, dim), dtype=jnp.float32)

    y = kan_layer_scale(x, gamma)
    y = jax.block_until_ready(y)

    # Reference check against plain JAX (same semantics as PyTorch x * gamma).
    y_ref = x * gamma
    assert y.shape == x.shape and y.dtype == y_ref.dtype
    assert jnp.allclose(y, y_ref, rtol=1e-6, atol=1e-6)

    print("KERNEL_OK")
</pallas_src>

<mosaic_0001>
module attributes {stable_mosaic.version = 11 : i64} {
  func.func @_layerscale_kernel(%arg0: i32, %arg1: memref<1x512xf32, #tpu.memory_space<vmem>>, %arg2: memref<1x512xf32, #tpu.memory_space<vmem>>, %arg3: memref<1x512xf32, #tpu.memory_space<vmem>>) attributes {dimension_semantics = [#tpu.dimension_semantics<parallel>], iteration_bounds = array<i64: 1>, scalar_prefetch = 0 : i64, scratch_operands = 0 : i64, tpu.core_type = #tpu.core_type<tc>, window_params = [{transform_indices = @transform_0, window_bounds = array<i64: 1, 512>}, {pipeline_mode = #tpu.pipeline_mode<synchronous>, transform_indices = @transform_1, window_bounds = array<i64: 1, 512>}, {transform_indices = @transform_2, window_bounds = array<i64: 1, 512>}]} {
    %c0 = arith.constant 0 : index
    %c0_0 = arith.constant 0 : index
    %0 = vector.load %arg1[%c0, %c0_0] : memref<1x512xf32, #tpu.memory_space<vmem>>, vector<1x512xf32>
    %c0_1 = arith.constant 0 : index
    %c0_2 = arith.constant 0 : index
    %1 = vector.load %arg2[%c0_1, %c0_2] : memref<1x512xf32, #tpu.memory_space<vmem>>, vector<1x512xf32>
    %2 = arith.mulf %0, %1 : vector<1x512xf32>
    %c0_3 = arith.constant 0 : index
    %c0_4 = arith.constant 0 : index
    %3 = vector.load %arg3[%c0_3, %c0_4] : memref<1x512xf32, #tpu.memory_space<vmem>>, vector<1x512xf32>
    tpu.vector_store %arg3[%c0_3, %c0_4], %2 {strides = array<i32>} : memref<1x512xf32, #tpu.memory_space<vmem>>, vector<1x512xf32>,
    return
  }
  func.func @transform_0(%arg0: i32) -> (i32, i32) {
    %c0_i32 = arith.constant 0 : i32
    %c0_i32_0 = arith.constant 0 : i32
    return %arg0, %c0_i32 : i32, i32
  }
  func.func @transform_1(%arg0: i32) -> (i32, i32) {
    %c0_i32 = arith.constant 0 : i32
    %c0_i32_0 = arith.constant 0 : i32
    %c0_i32_1 = arith.constant 0 : i32
    return %c0_i32, %c0_i32_0 : i32, i32
  }
  func.func @transform_2(%arg0: i32) -> (i32, i32) {
    %c0_i32 = arith.constant 0 : i32
    %c0_i32_0 = arith.constant 0 : i32
    return %arg0, %c0_i32 : i32, i32
  }
}

</mosaic_0001>

<llo_original>
// kernel: tpu_custom_call.1
$region0: #{tpu_custom_call.1}
  #allocation0 [shape = 'u32[]', space=smem, size = 0x4, offset = 0x4, fixed_abs, tag = 'smem constant byte address 0x4 - core index']
  #allocation1 [shape = 'u32[144,128]{1,0:T(1,128)}', space=vmem, size = 0x12000, scoped, tag = 'internal scratch']
  %s0 = inlined_call_operand.hbm [shape: f32[1,512], index: 0, kind: input, shape index: {}]
  %s1 = inlined_call_operand.hbm [shape: f32[1,512], index: 1, kind: input, shape index: {}]
  %s2 = inlined_call_operand.hbm [shape: f32[1,512], index: 2, kind: output, shape index: {}]
  %s3 = sld [smem:[#allocation0]]
  $region26: #{tpu_custom_call.1} parent=0
    _
  %s5 = ssub.s32 1, %s3
  %s6 = scalar_select 0, %s5, %s3
  $region1: #{tpu_custom_call.1} parent=0
    #allocation2 [shape = 'u8[2048]{0}', space=vmem, size = 0x800, scoped, tag = 'input window, operand 0, single buffered']
    #allocation3 [shape = 's32[1]{0}', space=sflag, size = 0x4, scoped, tag = 'scoped memory for tpu_custom_call.1']
    #allocation4 [shape = 's32[1]{0}', space=sflag, size = 0x4, scoped, tag = 'scoped memory for tpu_custom_call.1']
    #allocation5 [shape = 'u8[2048]{0}', space=vmem, size = 0x800, scoped, tag = 'input window, operand 1, single buffered']
    #allocation6 [shape = 's32[1]{0}', space=sflag, size = 0x4, scoped, tag = 'scoped memory for tpu_custom_call.1']
    #allocation7 [shape = 'u8[2048]{0}', space=vmem, size = 0x800, scoped, tag = 'output window, operand 0, single buffered']
    %7 = vsyncpa [#allocation3], 0
    %8 = vsyncpa [#allocation6], 0
    %9 = vsyncpa [#allocation4], 0
    // Predicated region
    $region2: #{tpu_custom_call.1} parent=1 // pred_check
      _
    $region3: #{tpu_custom_call.1} parent=1 // pred_check_branch
      %11 = sbr.rel (0) target = $region5
    $region4: #{tpu_custom_call.1} parent=1 // pred_region
      %s13 = ssub.s32 64, 64
      %14 = vsyncadd [#allocation3], %s13
      %s16 = sshll.u32 [#allocation2], 4
      %s17 = int_to_ptr.vmem [resolvable:$true] %s16
      %19 = dma.hbm_to_vmem [thread:$0]  %s0, 64, %s17, [#allocation3]
    $region5: #{tpu_custom_call.1} parent=1 // pred_fallthru
      _
    // Predicated region
    $region6: #{tpu_custom_call.1} parent=1 // pred_check
      _
    $region7: #{tpu_custom_call.1} parent=1 // pred_check_branch
      %21 = sbr.rel (0) target = $region9
    $region8: #{tpu_custom_call.1} parent=1 // pred_region
      %s23 = ssub.s32 64, 64
      %24 = vsyncadd [#allocation6], %s23
      %s26 = sshll.u32 [#allocation5], 4
      %s27 = int_to_ptr.vmem [resolvable:$true] %s26
      %29 = dma.hbm_to_vmem [thread:$0]  %s1, 64, %s27, [#allocation6]
    $region9: #{tpu_custom_call.1} parent=1 // pred_fallthru
      _
    // Predicated region
    $region10: #{tpu_custom_call.1} parent=1 // pred_check
      _
    $region11: #{tpu_custom_call.1} parent=1 // pred_check_branch
      %31 = sbr.rel (0) target = $region13
    $region12: #{tpu_custom_call.1} parent=1 // pred_region
      %32 = dma.done [#allocation3], 64
    $region13: #{tpu_custom_call.1} parent=1 // pred_fallthru
      _
    // Predicated region
    $region14: #{tpu_custom_call.1} parent=1 // pred_check
      _
    $region15: #{tpu_custom_call.1} parent=1 // pred_check_branch
      %34 = sbr.rel (0) target = $region17
    $region16: #{tpu_custom_call.1} parent=1 // pred_region
      %35 = dma.done [#allocation6], 64
    $region17: #{tpu_custom_call.1} parent=1 // pred_fallthru
      _
    %v36 = vld [vmem:[#allocation2] sm:$0xf]
    %v37 = vld [vmem:[#allocation5] sm:$0xf]
    %v38 = vmul.f32 %v36, %v37
    %v39 = vlaneseq
    %vm40 = vcmp.ge.s32.totalorder %v39, 0
    %vm41 = vcmp.lt.s32.totalorder %v39, 512
    %vm42 = vmand %vm40, %vm41
    %43 = vst.msk [vmem:[#allocation7] sm:$0xf] %vm42, %v38
    // Predicated region
    $region18: #{tpu_custom_call.1} parent=1 // pred_check
      _
    $region19: #{tpu_custom_call.1} parent=1 // pred_check_branch
      %45 = sbr.rel (0) target = $region21
    $region20: #{tpu_custom_call.1} parent=1 // pred_region
      %s47 = ssub.s32 64, 64
      %48 = vsyncadd [#allocation4], %s47
      %s50 = sshll.u32 [#allocation7], 4
      %s51 = int_to_ptr.vmem [resolvable:$true] %s50
      %53 = dma.vmem_to_hbm [thread:$0]  %s51, 64, %s2, [#allocation4]
    $region21: #{tpu_custom_call.1} parent=1 // pred_fallthru
      _
    // Predicated region
    $region22: #{tpu_custom_call.1} parent=1 // pred_check
      _
    $region23: #{tpu_custom_call.1} parent=1 // pred_check_branch
      %55 = sbr.rel (0) target = $region25
    $region24: #{tpu_custom_call.1} parent=1 // pred_region
      %56 = dma.done [#allocation4], 64
    $region25: #{tpu_custom_call.1} parent=1 // pred_fallthru
      _
    %57 = vsyncpa [#allocation3], 1
    %58 = vsyncpa [#allocation6], 1
    %59 = vsyncpa [#allocation4], 1

</llo_original>
